<compile_context>
chip_gen: v5e
topology: v5e:2x2
jax: 0.10.0
libtpu: 0.0.40
codegen_flags: <defaults>
</compile_context>

<pallas_src>
import functools
import math

import jax
import jax.numpy as jnp
from jax.experimental import pallas as pl
from jax.experimental.pallas import tpu as pltpu


# ---------------------------------------------------------------------------
# Parameter construction (mirrors ALiBi.__init__ / gen_slopes / build_alibi_bias)
# ---------------------------------------------------------------------------
def gen_slopes(n_heads, alibi_bias_max=8):
    _n_heads = 2 ** math.ceil(math.log2(n_heads))
    m = jnp.arange(1, _n_heads + 1, dtype=jnp.float32)
    m = m * (alibi_bias_max / _n_heads)
    slopes = 1.0 / jnp.power(2.0, m)
    if _n_heads != n_heads:
        slopes = jnp.concatenate([slopes[1::2], slopes[::2]])[:n_heads]
    return slopes.reshape(1, n_heads, 1, 1)


def build_alibi_bias(n_heads, seq_len, alibi_bias_max=8, dtype=jnp.float32):
    alibi_bias = jnp.arange(1 - seq_len, 1, dtype=jnp.int32).reshape(1, 1, 1, seq_len)
    slopes = gen_slopes(n_heads, alibi_bias_max)
    alibi_bias = alibi_bias * slopes
    slopes_sq = slopes.squeeze(0).squeeze(-1).squeeze(-1)
    return slopes_sq.astype(dtype), alibi_bias.astype(dtype)


# ---------------------------------------------------------------------------
# Pallas kernel: scores += slope[g] * (key_idx + 1 - max_seq_len)
# ---------------------------------------------------------------------------
def _alibi_add_kernel(scores_ref, slopes_ref, out_ref, *, max_seq_len, block_s):
    # scores_ref / out_ref: (TG, TQ, TS) VMEM tiles.  slopes_ref: (TG, 1, 1) VMEM.
    si = pl.program_id(2)

    # Absolute key index within the (sliced) sequence = si * TS + lane index.
    # Build the bias as a single row and broadcast over TQ (cheap on VALU/vregs).
    col = jax.lax.broadcasted_iota(jnp.int32, (1, 1, block_s), dimension=2)
    rel = (col + (si * block_s - (max_seq_len - 1))).astype(jnp.float32)  # (1,1,TS)
    bias = slopes_ref[...] * rel                                          # (TG,1,TS)

    out_ref[...] = (scores_ref[...].astype(jnp.float32) + bias).astype(out_ref.dtype)


_TILE_BYTES = 6 * 1024 * 1024        # ~6 MiB tiles: good on v5e/v6e/v7x
_VMEM_LIMIT = 48 * 1024 * 1024       # 4 buffers x 6 MiB + temps, < v7x 64 MiB/TC


def _auto_tiles(G, Q, S, itemsize):
    """Pick (TG, TQ, TS): prefer full-S contiguous tiles, fold (b,h) when small."""
    pack = max(8, 32 // itemsize)                 # sublane packing: 8 f32 / 16 bf16 / 32 i8
    budget = max(_TILE_BYTES // itemsize, pack * 128)   # elems per tile
    tq_min = min(Q, pack)

    # 1) Trailing dim: keep full S (one contiguous HBM transfer) if a minimal
    #    row-slab fits; split S only as a last resort (multiple of 128).
    if tq_min * S <= budget:
        ts = S
    else:
        ts = min(S, max(128, ((budget // tq_min) // 128) * 128))

    # 2) TQ: as large as fits, full dim or a multiple of the sublane packing.
    cap_q = max(pack, budget // ts)
    tq = Q if Q <= cap_q else (cap_q // pack) * pack

    # 3) Fold the flattened (batch*head) dim when a whole (Q, S) slab fits,
    #    keeping >= 2 leading grid steps so v7x can split across its 2 TCs.
    tg = 1
    if tq == Q and ts == S:
        tg = max(1, min(G, budget // (Q * S)))
        if tg > 1 and G > 1:
            tg = min(tg, pl.cdiv(G, 2))
    return tg, tq, ts


def alibi_forward(scores, slopes, max_seq_len, *, block_g=None, block_q=None, block_s=None):
    """scores: (B, H, Q, S); slopes: (H,).  Returns scores + bias[..., :S]."""
    B, H, Q, S = scores.shape
    assert S <= max_seq_len, "seqlen must not exceed max_seq_len"
    G = B * H

    itemsize = jnp.dtype(scores.dtype).itemsize
    tg, tq, ts = _auto_tiles(G, Q, S, itemsize)
    if block_g is not None:
        tg = block_g
    if block_q is not None:
        tq = block_q
    if block_s is not None:
        ts = block_s

    # Flatten (B, H) -> G so the leading parallel axis is well balanced and the
    # bias only depends on the leading row (per-row slope).
    scores3 = scores.reshape(G, Q, S)
    slopes_g = jnp.broadcast_to(
        slopes.astype(jnp.float32).reshape(1, H), (B, H)
    ).reshape(G, 1, 1)

    grid = (pl.cdiv(G, tg), pl.cdiv(Q, tq), pl.cdiv(S, ts))
    kernel = functools.partial(_alibi_add_kernel, max_seq_len=max_seq_len, block_s=ts)

    out3 = pl.pallas_call(
        kernel,
        out_shape=jax.ShapeDtypeStruct((G, Q, S), scores.dtype),
        grid=grid,
        in_specs=[
            pl.BlockSpec((tg, tq, ts), lambda g, qi, si: (g, qi, si)),
            pl.BlockSpec((tg, 1, 1), lambda g, qi, si: (g, 0, 0)),   # per-row slopes
        ],
        out_specs=pl.BlockSpec((tg, tq, ts), lambda g, qi, si: (g, qi, si)),
        input_output_aliases={0: 0},                                 # in-place add
        compiler_params=pltpu.CompilerParams(
            dimension_semantics=("parallel", "parallel", "parallel"),
            vmem_limit_bytes=_VMEM_LIMIT,
        ),
    )(scores3, slopes_g)

    return out3.reshape(B, H, Q, S)


# ---------------------------------------------------------------------------
# Demo / correctness check
# ---------------------------------------------------------------------------
if __name__ == "__main__":
    n_heads = 4
    max_seq_len = 512
    batch = 2
    q_len = 128
    seqlen = 256

    # Deterministic "parameters" (ALiBi has no trainable weights).
    slopes, bias_full = build_alibi_bias(n_heads, max_seq_len, alibi_bias_max=8)

    key = jax.random.PRNGKey(0)
    scores = jax.random.normal(key, (batch, n_heads, q_len, seqlen), dtype=jnp.float32)

    # Pure-JAX reference with the same semantics as the PyTorch forward.
    ref = scores + bias_full[..., :seqlen]

    # 1) Auto-tiled call: exercises the TG > 1 (batch*head folding) path
    #    (G=8 -> TG=4, grid (2, 1, 1)).
    out = jax.block_until_ready(alibi_forward(scores, slopes, max_seq_len))
    assert jnp.allclose(out, ref, atol=1e-5, rtol=1e-5), "mismatch (auto tiles)"

    # 2) Force the fully tiled path (grid (8, 4, 2)) to exercise the in-kernel
    #    bias offset math across Q and S tiles with TG = 1.
    out_tiled = jax.block_until_ready(
        alibi_forward(scores, slopes, max_seq_len, block_g=1, block_q=32, block_s=128)
    )
    assert jnp.allclose(out_tiled, ref, atol=1e-5, rtol=1e-5), "mismatch (tiled)"

    print("KERNEL_OK")
</pallas_src>

<mosaic_0001>
module attributes {stable_mosaic.version = 11 : i64} {
  func.func @_alibi_add_kernel(%arg0: i32, %arg1: i32, %arg2: i32, %arg3: memref<4x128x256xf32, #tpu.memory_space<vmem>>, %arg4: memref<4x1x1xf32, #tpu.memory_space<vmem>>, %arg5: memref<4x128x256xf32, #tpu.memory_space<vmem>>) attributes {dimension_semantics = [#tpu.dimension_semantics<parallel>, #tpu.dimension_semantics<parallel>, #tpu.dimension_semantics<parallel>], iteration_bounds = array<i64: 2, 1, 1>, scalar_prefetch = 0 : i64, scratch_operands = 0 : i64, tpu.core_type = #tpu.core_type<tc>, window_params = [{transform_indices = @transform_0, window_bounds = array<i64: 4, 128, 256>}, {transform_indices = @transform_1, window_bounds = array<i64: 4, 1, 1>}, {transform_indices = @transform_2, window_bounds = array<i64: 4, 128, 256>}]} {
    %0 = tpu.iota {dimensions = array<i32: 2>} : vector<1x1x256xi32>
    %c256_i32 = arith.constant 256 : i32
    %1 = arith.muli %arg2, %c256_i32 : i32
    %c511_i32 = arith.constant 511 : i32
    %2 = arith.subi %1, %c511_i32 : i32
    %3 = vector.broadcast %2 : i32 to vector<1x1x256xi32>
    %4 = arith.addi %0, %3 : vector<1x1x256xi32>
    %5 = arith.sitofp %4 : vector<1x1x256xi32> to vector<1x1x256xf32>
    %c0 = arith.constant 0 : index
    %c0_0 = arith.constant 0 : index
    %c0_1 = arith.constant 0 : index
    %6 = vector.load %arg4[%c0, %c0_0, %c0_1] : memref<4x1x1xf32, #tpu.memory_space<vmem>>, vector<4x1x1xf32>
    %7 = vector.broadcast %6 : vector<4x1x1xf32> to vector<4x1x256xf32>
    %8 = vector.broadcast %5 : vector<1x1x256xf32> to vector<4x1x256xf32>
    %9 = arith.mulf %7, %8 : vector<4x1x256xf32>
    %c0_2 = arith.constant 0 : index
    %c0_3 = arith.constant 0 : index
    %c0_4 = arith.constant 0 : index
    %10 = vector.load %arg3[%c0_2, %c0_3, %c0_4] : memref<4x128x256xf32, #tpu.memory_space<vmem>>, vector<4x128x256xf32>
    %11 = vector.broadcast %9 : vector<4x1x256xf32> to vector<4x128x256xf32>
    %12 = arith.addf %10, %11 : vector<4x128x256xf32>
    %c0_5 = arith.constant 0 : index
    %c0_6 = arith.constant 0 : index
    %c0_7 = arith.constant 0 : index
    %13 = vector.load %arg5[%c0_5, %c0_6, %c0_7] : memref<4x128x256xf32, #tpu.memory_space<vmem>>, vector<4x128x256xf32>
    tpu.vector_store %arg5[%c0_5, %c0_6, %c0_7], %12 {strides = array<i32>} : memref<4x128x256xf32, #tpu.memory_space<vmem>>, vector<4x128x256xf32>,
    return
  }
  func.func @transform_0(%arg0: i32, %arg1: i32, %arg2: i32) -> (i32, i32, i32) {
    %c0_i32 = arith.constant 0 : i32
    return %arg0, %arg1, %arg2 : i32, i32, i32
  }
  func.func @transform_1(%arg0: i32, %arg1: i32, %arg2: i32) -> (i32, i32, i32) {
    %c0_i32 = arith.constant 0 : i32
    %c0_i32_0 = arith.constant 0 : i32
    %c0_i32_1 = arith.constant 0 : i32
    return %arg0, %c0_i32, %c0_i32_0 : i32, i32, i32
  }
  func.func @transform_2(%arg0: i32, %arg1: i32, %arg2: i32) -> (i32, i32, i32) {
    %c0_i32 = arith.constant 0 : i32
    return %arg0, %arg1, %arg2 : i32, i32, i32
  }
}

</mosaic_0001>

<llo_original>
// kernel: tpu_custom_call.1
$region0: #{tpu_custom_call.1}
  #allocation0 [shape = 'u32[]', space=smem, size = 0x4, offset = 0x4, fixed_abs, tag = 'smem constant byte address 0x4 - core index']
  #allocation1 [shape = 'u32[72,128]{1,0:T(1,128)}', space=vmem, size = 0x9000, scoped, tag = 'internal scratch']
  %s0 = inlined_call_operand.hbm [shape: f32[8,128,256], index: 0, kind: input, shape index: {}, may-alias: {0,2}]
  %s1 = inlined_call_operand.vmem [shape: f32[8,1,1], index: 1, kind: input, shape index: {}]
  %s2 = inlined_call_operand.hbm [shape: f32[8,128,256], index: 2, kind: output, shape index: {}, may-alias: {0,2}]
  %s3 = sld [smem:[#allocation0]]
  $region45: #{tpu_custom_call.1} parent=0
    _
  %s5 = ssub.s32 1, %s3
  %s6 = scalar_select 0, %s5, %s3
  $region1: #{tpu_custom_call.1} parent=0
    #allocation2 [shape = 'u8[1048576]{0}', space=vmem, size = 0x100000, scoped, tag = 'input window, operand 0']
    #allocation3 [shape = 's32[2]{0}', space=sflag, size = 0x8, scoped, tag = 'scoped memory for tpu_custom_call.1']
    #allocation4 [shape = 's32[2]{0}', space=sflag, size = 0x8, scoped, tag = 'scoped memory for tpu_custom_call.1']
    #allocation5 [shape = 'u8[1048576]{0}', space=vmem, size = 0x100000, scoped, tag = 'output window, operand 0']
    %7 = vsyncpa [#allocation3], 0
    %s8 = scalar_lea.sflag [#allocation3], 1
    %9 = vsyncpa %s8, 0
    %10 = vsyncpa [#allocation4], 0
    %s11 = scalar_lea.sflag [#allocation4], 1
    %12 = vsyncpa %s11, 0
    loop: start=0, step=1, limit=4
    $region2: #{tpu_custom_call.1} parent=1 // loop_pre_header
      _
    $region3: #{tpu_custom_call.1} parent=1 // loop_header
      %s14 = sphi 0, %s18
      %p15 = scmp.ge.s32.totalorder %s14, 4
      %s21 = sphi 0, %s40
      %s22 = sphi 0, %s36
      %s23 = sphi 0, %s32
      %s24 = sphi 0, %s21
      %s25 = sphi 0, %s22
      %s26 = sphi 0, %s23
      %s27 = sphi 0, %s24
      %s28 = sphi 0, %s25
      %s29 = sphi 0, %s26
      %s47 = sphi 0, %s49
      %s50 = sphi 0, %s47
      %s51 = sphi 0, %s50
      %s67 = sphi 0, %s51
      %s73 = sphi 0, %s75
      %s76 = sphi 0, %s73
      %s77 = sphi 0, %s76
      %s93 = sphi 0, %s77
      %s103 = sphi 0, %s105
      %s106 = sphi 0, %s103
      %s107 = sphi 0, %s106
      %s123 = sphi 0, %s107
    $region4: #{tpu_custom_call.1} parent=1 // loop_header_branch
      %17 = sbr.rel (%p15) target = $region8
    $region5: #{tpu_custom_call.1} parent=1 // loop_body
      %s19 = ssub.s32 %s14, 1
      %s20 = ssub.s32 %s14, 2
      %s30 = sadd.s32 1, %s23
      %p31 = scmp.ge.s32.totalorder %s30, 1
      %s32 = scalar_select %p31, 0, %s30
      %s33 = sadd.s32 1, %s22
      %s34 = scalar_select %p31, %s33, %s22
      %p35 = scmp.ge.s32.totalorder %s34, 1
      %s36 = scalar_select %p35, 0, %s34
      %s37 = sadd.s32 1, %s21
      %s38 = scalar_select %p35, %s37, %s21
      %p39 = scmp.ge.s32.totalorder %s38, 2
      %s40 = scalar_select %p39, 0, %s38
      %s41 = ssub.s32 %s21, %s40
      %s42 = ssub.s32 %s22, %s36
      %s43 = sor.u32 %s41, %s42
      %s44 = ssub.s32 %s23, %s32
      %s45 = sor.u32 %s43, %s44
      %p46 = scmp.eq.s32.totalorder %s45, 0
      %s48 = sadd.s32 %s47, 1
      %s49 = scalar_select %p46, %s47, %s48
      %p52 = pneg %p46
      %p53 = scmp.eq.s32.totalorder %s14, 1
      %p54 = por %p52, %p53
      %p55 = scmp.ne.s32.totalorder %s47, %s50
      %p56 = scmp.eq.s32.totalorder %s14, 0
      %p57 = por %p55, %p56
      %p58 = scmp.ne.s32.totalorder %s47, %s50
      %p59 = scmp.eq.s32.totalorder %s19, 1
      %p60 = por %p58, %p59
      %p61 = scmp.ne.s32.totalorder %s50, %s51
      %p62 = scmp.eq.s32.totalorder %s19, 0
      %p63 = por %p61, %p62
      %p64 = scmp.ne.s32.totalorder %s50, %s51
      %p65 = scmp.eq.s32.totalorder %s20, 1
      %p66 = por %p64, %p65
      %p68 = scmp.ne.s32.totalorder %s51, %s67
      %p69 = scmp.eq.s32.totalorder %s20, 0
      %p70 = por %p68, %p69
      %s71 = ssub.s32 %s21, %s40
      %p72 = scmp.eq.s32.totalorder %s71, 0
      %s74 = sadd.s32 %s73, 1
      %s75 = scalar_select %p72, %s73, %s74
      %p78 = pneg %p72
      %p79 = scmp.eq.s32.totalorder %s14, 1
      %p80 = por %p78, %p79
      %p81 = scmp.ne.s32.totalorder %s73, %s76
      %p82 = scmp.eq.s32.totalorder %s14, 0
      %p83 = por %p81, %p82
      %p84 = scmp.ne.s32.totalorder %s73, %s76
      %p85 = scmp.eq.s32.totalorder %s19, 1
      %p86 = por %p84, %p85
      %p87 = scmp.ne.s32.totalorder %s76, %s77
      %p88 = scmp.eq.s32.totalorder %s19, 0
      %p89 = por %p87, %p88
      %p90 = scmp.ne.s32.totalorder %s76, %s77
      %p91 = scmp.eq.s32.totalorder %s20, 1
      %p92 = por %p90, %p91
      %p94 = scmp.ne.s32.totalorder %s77, %s93
      %p95 = scmp.eq.s32.totalorder %s20, 0
      %p96 = por %p94, %p95
      %s97 = ssub.s32 %s21, %s40
      %s98 = ssub.s32 %s22, %s36
      %s99 = sor.u32 %s97, %s98
      %s100 = ssub.s32 %s23, %s32
      %s101 = sor.u32 %s99, %s100
      %p102 = scmp.eq.s32.totalorder %s101, 0
      %s104 = sadd.s32 %s103, 1
      %s105 = scalar_select %p102, %s103, %s104
      %p108 = pneg %p102
      %p109 = scmp.eq.s32.totalorder %s14, 1
      %p110 = por %p108, %p109
      %p111 = scmp.ne.s32.totalorder %s103, %s106
      %p112 = scmp.eq.s32.totalorder %s14, 0
      %p113 = por %p111, %p112
      %p114 = scmp.ne.s32.totalorder %s103, %s106
      %p115 = scmp.eq.s32.totalorder %s19, 1
      %p116 = por %p114, %p115
      %p117 = scmp.ne.s32.totalorder %s106, %s107
      %p118 = scmp.eq.s32.totalorder %s19, 0
      %p119 = por %p117, %p118
      %p120 = scmp.ne.s32.totalorder %s106, %s107
      %p121 = scmp.eq.s32.totalorder %s20, 1
      %p122 = por %p120, %p121
      %p124 = scmp.ne.s32.totalorder %s107, %s123
      %p125 = scmp.eq.s32.totalorder %s20, 0
      %p126 = por %p124, %p125
      %p127 = scmp.le.s32.totalorder 1, %s14
      %p128 = scmp.lt.s32.totalorder %s14, 3
      %p129 = pnand %p127, %p128
      %p130 = pneg %p129
      // Predicated region
      $region9: #{tpu_custom_call.1} parent=5 // pred_check
        _
      $region10: #{tpu_custom_call.1} parent=5 // pred_check_branch
        %132 = sbr.rel (%p129) target = $region12
      $region11: #{tpu_custom_call.1} parent=5 // pred_region
        %s133 = ssub.s32 %s14, 1
      $region12: #{tpu_custom_call.1} parent=5 // pred_fallthru
        _
      %p134 = scmp.lt.s32.totalorder %s14, 2
      // Predicated region
      $region13: #{tpu_custom_call.1} parent=5 // pred_check
        %p135 = pneg %p134
      $region14: #{tpu_custom_call.1} parent=5 // pred_check_branch
        %137 = sbr.rel (%p135) target = $region16
      $region15: #{tpu_custom_call.1} parent=5 // pred_region
        // Predicated region
        $region17: #{tpu_custom_call.1} parent=15 // pred_check
          %p138 = pneg %p57
        $region18: #{tpu_custom_call.1} parent=15 // pred_check_branch
          %140 = sbr.rel (%p138) target = $region20
        $region19: #{tpu_custom_call.1} parent=15 // pred_region
          %s141 = sand.u32 %s47, 1
          %s142 = scalar_lea.sflag [#allocation3], %s141
          %s143 = sand.u32 %s47, 1
          %s144 = smul.addr %s143, 1024
          %s145 = scalar_lea.vmem [#allocation2], %s144
          %s146 = smul.u32 4, %s21
          %s147 = smul.u32 16, %s22
          %s148 = smul.u32 2, %s23
          %150 = vsyncadd %s142, 0
          %s151 = smul.addr %s147, 2
          %s152 = sadd.s32 %s148, %s151
          %s153 = smul.addr %s146, 32
          %s154 = sadd.s32 %s152, %s153
          %s155 = smul.addr %s154, 8
          %s156 = scalar_lea.hbm %s0, %s155
          %s157 = sshll.u32 %s156, 4
          %s158 = int_to_ptr.hbm [resolvable:$true] %s157
          %s159 = sshll.u32 %s145, 4
          %s160 = int_to_ptr.vmem [resolvable:$true] %s159
          %165 = dma.hbm_to_vmem [thread:$0]  %s158, 16384, %s160, %s142, 256, 256, 16
        $region20: #{tpu_custom_call.1} parent=15 // pred_fallthru
          _
        // Predicated region
        $region21: #{tpu_custom_call.1} parent=15 // pred_check
          %p166 = pneg %p83
        $region22: #{tpu_custom_call.1} parent=15 // pred_check_branch
          %168 = sbr.rel (%p166) target = $region24
        $region23: #{tpu_custom_call.1} parent=15 // pred_region
          %s169 = smul.u32 4, %s21
          %p170 = scmp.lt.s32.totalorder %s169, 7
          %s171 = scalar_select %p170, %s169, 7
          %s172 = scalar_lea.vmem %s1, %s171
          %s173 = smul.u32 4, %s21
        $region24: #{tpu_custom_call.1} parent=15 // pred_fallthru
          _
      $region16: #{tpu_custom_call.1} parent=5 // pred_fallthru
        _
      %p174 = scmp.le.s32.totalorder 1, %s14
      %p175 = scmp.lt.s32.totalorder %s14, 3
      %p176 = pnand %p174, %p175
      %p177 = pneg %p176
      // Predicated region
      $region25: #{tpu_custom_call.1} parent=5 // pred_check
        _
      $region26: #{tpu_custom_call.1} parent=5 // pred_check_branch
        %179 = sbr.rel (%p176) target = $region28
      $region27: #{tpu_custom_call.1} parent=5 // pred_region
        %s180 = ssub.s32 %s14, 1
        %s181 = sand.u32 %s50, 1
        %s182 = scalar_lea.sflag [#allocation3], %s181
        %s183 = sand.u32 %s50, 1
        %s184 = smul.addr %s183, 1024
        %s185 = scalar_lea.vmem [#allocation2], %s184
        // Predicated region
        $region29: #{tpu_custom_call.1} parent=27 // pred_check
          %p186 = pneg %p63
        $region30: #{tpu_custom_call.1} parent=27 // pred_check_branch
          %188 = sbr.rel (%p186) target = $region32
        $region31: #{tpu_custom_call.1} parent=27 // pred_region
          %190 = dma.done %s182, 16384
        $region32: #{tpu_custom_call.1} parent=27 // pred_fallthru
          _
        %s191 = sand.u32 %s50, 1
        %s192 = scalar_lea.sflag [#allocation3], %s191
        %s193 = sand.u32 %s50, 1
        %s194 = smul.addr %s193, 1024
        %s195 = scalar_lea.vmem [#allocation2], %s194
        %p196 = pneg %p63
        %p197 = pneg %p60
        %s198 = smul.u32 4, %s24
        %p199 = scmp.lt.s32.totalorder %s198, 7
        %s200 = scalar_select %p199, %s198, 7
        %s201 = scalar_lea.vmem %s1, %s200
        %p202 = pneg %p89
        %p203 = pneg %p86
        %p204 = pneg %p119
        %p205 = pneg %p116
        %s206 = sand.u32 %s106, 1
        %s207 = scalar_lea.sflag [#allocation4], %s206
        %s208 = sand.u32 %s106, 1
        %s209 = smul.addr %s208, 1024
        %s210 = scalar_lea.vmem [#allocation5], %s209
        %s211 = smul.u32 4, %s24
        %s212 = smul.u32 16, %s25
        %s213 = smul.u32 2, %s26
        %s214 = smul.u32 4, %s24
        %p215 = scmp.lt.s32.totalorder %s214, 7
        %s216 = scalar_select %p215, %s214, 7
        %s217 = scalar_lea.vmem %s1, %s216
        %s218 = smul.u32 4, %s24
        %s219 = smul.u32 4, %s24
        %s220 = smul.u32 16, %s25
        %s221 = smul.u32 2, %s26
        %v222 = vlaneseq
        %v223 = vand.u32 %v222, 127
        %v224 = vadd.s32 %v223, 128
        %s225 = smul.u32 %s26, 256
        %s226 = ssub.s32 %s225, 511
        %v227 = vstv %s226
        %v228 = vadd.s32 %v223, %v227
        %v229 = vadd.s32 %v224, %v227
        %v230 = vcvt.s32.f32 %v228
        %v231 = vcvt.s32.f32 %v229
        %v232 = vld [vmem:[%s217] sm:$0x1]
        %v233 = vld [vmem:[%s217 + $0x1] sm:$0x1]
        %v234 = vld [vmem:[%s217 + $0x2] sm:$0x1]
        %v235 = vld [vmem:[%s217 + $0x3] sm:$0x1]
        %237 = vset.pattern.permute.xlu0 0
        %238 = vperm.xlu0 %237, %v232
        %v239 = vpop.permute.xlu0 %238
        %v241 = vperm.slane %v239, 0
        %243 = vset.pattern.permute.xlu0 0
        %244 = vperm.xlu0 %243, %v233
        %v245 = vpop.permute.xlu0 %244
        %v247 = vperm.slane %v245, 0
        %249 = vset.pattern.permute.xlu0 0
        %250 = vperm.xlu0 %249, %v234
        %v251 = vpop.permute.xlu0 %250
        %v253 = vperm.slane %v251, 0
        %255 = vset.pattern.permute.xlu0 0
        %256 = vperm.xlu0 %255, %v235
        %v257 = vpop.permute.xlu0 %256
        %v259 = vperm.slane %v257, 0
        %v260 = vmul.f32 %v241, %v230
        %v261 = vmul.f32 %v241, %v231
        %v262 = vmul.f32 %v247, %v230
        %v263 = vmul.f32 %v247, %v231
        %v264 = vmul.f32 %v253, %v230
        %v265 = vmul.f32 %v253, %v231
        %v266 = vmul.f32 %v259, %v230
        %v267 = vmul.f32 %v259, %v231
        %v268 = vld [vmem:[%s185] sm:$0xff]
        %v269 = vld [vmem:[%s185 + $0x8] sm:$0xff]
        %v270 = vld [vmem:[%s185 + $0x10] sm:$0xff]
        %v271 = vld [vmem:[%s185 + $0x18] sm:$0xff]
        %v272 = vld [vmem:[%s185 + $0x20] sm:$0xff]
        %v273 = vld [vmem:[%s185 + $0x28] sm:$0xff]
        %v274 = vld [vmem:[%s185 + $0x30] sm:$0xff]
        %v275 = vld [vmem:[%s185 + $0x38] sm:$0xff]
        %v276 = vld [vmem:[%s185 + $0x40] sm:$0xff]
        %v277 = vld [vmem:[%s185 + $0x48] sm:$0xff]
        %v278 = vld [vmem:[%s185 + $0x50] sm:$0xff]
        %v279 = vld [vmem:[%s185 + $0x58] sm:$0xff]
        %v280 = vld [vmem:[%s185 + $0x60] sm:$0xff]
        %v281 = vld [vmem:[%s185 + $0x68] sm:$0xff]
        %v282 = vld [vmem:[%s185 + $0x70] sm:$0xff]
        %v283 = vld [vmem:[%s185 + $0x78] sm:$0xff]
        %v284 = vld [vmem:[%s185 + $0x80] sm:$0xff]
        %v285 = vld [vmem:[%s185 + $0x88] sm:$0xff]
        %v286 = vld [vmem:[%s185 + $0x90] sm:$0xff]
        %v287 = vld [vmem:[%s185 + $0x98] sm:$0xff]
        %v288 = vld [vmem:[%s185 + $0xa0] sm:$0xff]
        %v289 = vld [vmem:[%s185 + $0xa8] sm:$0xff]
        %v290 = vld [vmem:[%s185 + $0xb0] sm:$0xff]
        %v291 = vld [vmem:[%s185 + $0xb8] sm:$0xff]
        %v292 = vld [vmem:[%s185 + $0xc0] sm:$0xff]
        %v293 = vld [vmem:[%s185 + $0xc8] sm:$0xff]
        %v294 = vld [vmem:[%s185 + $0xd0] sm:$0xff]
        %v295 = vld [vmem:[%s185 + $0xd8] sm:$0xff]
        %v296 = vld [vmem:[%s185 + $0xe0] sm:$0xff]
        %v297 = vld [vmem:[%s185 + $0xe8] sm:$0xff]
        %v298 = vld [vmem:[%s185 + $0xf0] sm:$0xff]
        %v299 = vld [vmem:[%s185 + $0xf8] sm:$0xff]
        %v300 = vld [vmem:[%s185 + $0x100] sm:$0xff]
        %v301 = vld [vmem:[%s185 + $0x108] sm:$0xff]
        %v302 = vld [vmem:[%s185 + $0x110] sm:$0xff]
        %v303 = vld [vmem:[%s185 + $0x118] sm:$0xff]
        %v304 = vld [vmem:[%s185 + $0x120] sm:$0xff]
        %v305 = vld [vmem:[%s185 + $0x128] sm:$0xff]
        %v306 = vld [vmem:[%s185 + $0x130] sm:$0xff]
        %v307 = vld [vmem:[%s185 + $0x138] sm:$0xff]
        %v308 = vld [vmem:[%s185 + $0x140] sm:$0xff]
        %v309 = vld [vmem:[%s185 + $0x148] sm:$0xff]
        %v310 = vld [vmem:[%s185 + $0x150] sm:$0xff]
        %v311 = vld [vmem:[%s185 + $0x158] sm:$0xff]
        %v312 = vld [vmem:[%s185 + $0x160] sm:$0xff]
        %v313 = vld [vmem:[%s185 + $0x168] sm:$0xff]
        %v314 = vld [vmem:[%s185 + $0x170] sm:$0xff]
        %v315 = vld [vmem:[%s185 + $0x178] sm:$0xff]
        %v316 = vld [vmem:[%s185 + $0x180] sm:$0xff]
        %v317 = vld [vmem:[%s185 + $0x188] sm:$0xff]
        %v318 = vld [vmem:[%s185 + $0x190] sm:$0xff]
        %v319 = vld [vmem:[%s185 + $0x198] sm:$0xff]
        %v320 = vld [vmem:[%s185 + $0x1a0] sm:$0xff]
        %v321 = vld [vmem:[%s185 + $0x1a8] sm:$0xff]
        %v322 = vld [vmem:[%s185 + $0x1b0] sm:$0xff]
        %v323 = vld [vmem:[%s185 + $0x1b8] sm:$0xff]
        %v324 = vld [vmem:[%s185 + $0x1c0] sm:$0xff]
        %v325 = vld [vmem:[%s185 + $0x1c8] sm:$0xff]
        %v326 = vld [vmem:[%s185 + $0x1d0] sm:$0xff]
        %v327 = vld [vmem:[%s185 + $0x1d8] sm:$0xff]
        %v328 = vld [vmem:[%s185 + $0x1e0] sm:$0xff]
        %v329 = vld [vmem:[%s185 + $0x1e8] sm:$0xff]
        %v330 = vld [vmem:[%s185 + $0x1f0] sm:$0xff]
        %v331 = vld [vmem:[%s185 + $0x1f8] sm:$0xff]
        %v332 = vld [vmem:[%s185 + $0x200] sm:$0xff]
        %v333 = vld [vmem:[%s185 + $0x208] sm:$0xff]
        %v334 = vld [vmem:[%s185 + $0x210] sm:$0xff]
        %v335 = vld [vmem:[%s185 + $0x218] sm:$0xff]
        %v336 = vld [vmem:[%s185 + $0x220] sm:$0xff]
        %v337 = vld [vmem:[%s185 + $0x228] sm:$0xff]
        %v338 = vld [vmem:[%s185 + $0x230] sm:$0xff]
        %v339 = vld [vmem:[%s185 + $0x238] sm:$0xff]
        %v340 = vld [vmem:[%s185 + $0x240] sm:$0xff]
        %v341 = vld [vmem:[%s185 + $0x248] sm:$0xff]
        %v342 = vld [vmem:[%s185 + $0x250] sm:$0xff]
        %v343 = vld [vmem:[%s185 + $0x258] sm:$0xff]
        %v344 = vld [vmem:[%s185 + $0x260] sm:$0xff]
        %v345 = vld [vmem:[%s185 + $0x268] sm:$0xff]
        %v346 = vld [vmem:[%s185 + $0x270] sm:$0xff]
        %v347 = vld [vmem:[%s185 + $0x278] sm:$0xff]
        %v348 = vld [vmem:[%s185 + $0x280] sm:$0xff]
        %v349 = vld [vmem:[%s185 + $0x288] sm:$0xff]
        %v350 = vld [vmem:[%s185 + $0x290] sm:$0xff]
        %v351 = vld [vmem:[%s185 + $0x298] sm:$0xff]
        %v352 = vld [vmem:[%s185 + $0x2a0] sm:$0xff]
        %v353 = vld [vmem:[%s185 + $0x2a8] sm:$0xff]
        %v354 = vld [vmem:[%s185 + $0x2b0] sm:$0xff]
        %v355 = vld [vmem:[%s185 + $0x2b8] sm:$0xff]
        %v356 = vld [vmem:[%s185 + $0x2c0] sm:$0xff]
        %v357 = vld [vmem:[%s185 + $0x2c8] sm:$0xff]
        %v358 = vld [vmem:[%s185 + $0x2d0] sm:$0xff]
        %v359 = vld [vmem:[%s185 + $0x2d8] sm:$0xff]
        %v360 = vld [vmem:[%s185 + $0x2e0] sm:$0xff]
        %v361 = vld [vmem:[%s185 + $0x2e8] sm:$0xff]
        %v362 = vld [vmem:[%s185 + $0x2f0] sm:$0xff]
        %v363 = vld [vmem:[%s185 + $0x2f8] sm:$0xff]
        %v364 = vld [vmem:[%s185 + $0x300] sm:$0xff]
        %v365 = vld [vmem:[%s185 + $0x308] sm:$0xff]
        %v366 = vld [vmem:[%s185 + $0x310] sm:$0xff]
        %v367 = vld [vmem:[%s185 + $0x318] sm:$0xff]
        %v368 = vld [vmem:[%s185 + $0x320] sm:$0xff]
        %v369 = vld [vmem:[%s185 + $0x328] sm:$0xff]
        %v370 = vld [vmem:[%s185 + $0x330] sm:$0xff]
        %v371 = vld [vmem:[%s185 + $0x338] sm:$0xff]
        %v372 = vld [vmem:[%s185 + $0x340] sm:$0xff]
        %v373 = vld [vmem:[%s185 + $0x348] sm:$0xff]
        %v374 = vld [vmem:[%s185 + $0x350] sm:$0xff]
        %v375 = vld [vmem:[%s185 + $0x358] sm:$0xff]
        %v376 = vld [vmem:[%s185 + $0x360] sm:$0xff]
        %v377 = vld [vmem:[%s185 + $0x368] sm:$0xff]
        %v378 = vld [vmem:[%s185 + $0x370] sm:$0xff]
        %v379 = vld [vmem:[%s185 + $0x378] sm:$0xff]
        %v380 = vld [vmem:[%s185 + $0x380] sm:$0xff]
        %v381 = vld [vmem:[%s185 + $0x388] sm:$0xff]
        %v382 = vld [vmem:[%s185 + $0x390] sm:$0xff]
        %v383 = vld [vmem:[%s185 + $0x398] sm:$0xff]
        %v384 = vld [vmem:[%s185 + $0x3a0] sm:$0xff]
        %v385 = vld [vmem:[%s185 + $0x3a8] sm:$0xff]
        %v386 = vld [vmem:[%s185 + $0x3b0] sm:$0xff]
        %v387 = vld [vmem:[%s185 + $0x3b8] sm:$0xff]
        %v388 = vld [vmem:[%s185 + $0x3c0] sm:$0xff]
        %v389 = vld [vmem:[%s185 + $0x3c8] sm:$0xff]
        %v390 = vld [vmem:[%s185 + $0x3d0] sm:$0xff]
        %v391 = vld [vmem:[%s185 + $0x3d8] sm:$0xff]
        %v392 = vld [vmem:[%s185 + $0x3e0] sm:$0xff]
        %v393 = vld [vmem:[%s185 + $0x3e8] sm:$0xff]
        %v394 = vld [vmem:[%s185 + $0x3f0] sm:$0xff]
        %v395 = vld [vmem:[%s185 + $0x3f8] sm:$0xff]
        %v396 = vadd.f32 %v268, %v260
        %v397 = vadd.f32 %v269, %v261
        %v398 = vadd.f32 %v270, %v260
        %v399 = vadd.f32 %v271, %v261
        %v400 = vadd.f32 %v272, %v260
        %v401 = vadd.f32 %v273, %v261
        %v402 = vadd.f32 %v274, %v260
        %v403 = vadd.f32 %v275, %v261
        %v404 = vadd.f32 %v276, %v260
        %v405 = vadd.f32 %v277, %v261
        %v406 = vadd.f32 %v278, %v260
        %v407 = vadd.f32 %v279, %v261
        %v408 = vadd.f32 %v280, %v260
        %v409 = vadd.f32 %v281, %v261
        %v410 = vadd.f32 %v282, %v260
        %v411 = vadd.f32 %v283, %v261
        %v412 = vadd.f32 %v284, %v260
        %v413 = vadd.f32 %v285, %v261
        %v414 = vadd.f32 %v286, %v260
        %v415 = vadd.f32 %v287, %v261
        %v416 = vadd.f32 %v288, %v260
        %v417 = vadd.f32 %v289, %v261
        %v418 = vadd.f32 %v290, %v260
        %v419 = vadd.f32 %v291, %v261
        %v420 = vadd.f32 %v292, %v260
        %v421 = vadd.f32 %v293, %v261
        %v422 = vadd.f32 %v294, %v260
        %v423 = vadd.f32 %v295, %v261
        %v424 = vadd.f32 %v296, %v260
        %v425 = vadd.f32 %v297, %v261
        %v426 = vadd.f32 %v298, %v260
        %v427 = vadd.f32 %v299, %v261
        %v428 = vadd.f32 %v300, %v262
        %v429 = vadd.f32 %v301, %v263
        %v430 = vadd.f32 %v302, %v262
        %v431 = vadd.f32 %v303, %v263
        %v432 = vadd.f32 %v304, %v262
        %v433 = vadd.f32 %v305, %v263
        %v434 = vadd.f32 %v306, %v262
        %v435 = vadd.f32 %v307, %v263
        %v436 = vadd.f32 %v308, %v262
        %v437 = vadd.f32 %v309, %v263
        %v438 = vadd.f32 %v310, %v262
        %v439 = vadd.f32 %v311, %v263
        %v440 = vadd.f32 %v312, %v262
        %v441 = vadd.f32 %v313, %v263
        %v442 = vadd.f32 %v314, %v262
        %v443 = vadd.f32 %v315, %v263
        %v444 = vadd.f32 %v316, %v262
        %v445 = vadd.f32 %v317, %v263
        %v446 = vadd.f32 %v318, %v262
        %v447 = vadd.f32 %v319, %v263
        %v448 = vadd.f32 %v320, %v262
        %v449 = vadd.f32 %v321, %v263
        %v450 = vadd.f32 %v322, %v262
        %v451 = vadd.f32 %v323, %v263
        %v452 = vadd.f32 %v324, %v262
        %v453 = vadd.f32 %v325, %v263
        %v454 = vadd.f32 %v326, %v262
        %v455 = vadd.f32 %v327, %v263
        %v456 = vadd.f32 %v328, %v262
        %v457 = vadd.f32 %v329, %v263
        %v458 = vadd.f32 %v330, %v262
        %v459 = vadd.f32 %v331, %v263
        %v460 = vadd.f32 %v332, %v264
        %v461 = vadd.f32 %v333, %v265
        %v462 = vadd.f32 %v334, %v264
        %v463 = vadd.f32 %v335, %v265
        %v464 = vadd.f32 %v336, %v264
        %v465 = vadd.f32 %v337, %v265
        %v466 = vadd.f32 %v338, %v264
        %v467 = vadd.f32 %v339, %v265
        %v468 = vadd.f32 %v340, %v264
        %v469 = vadd.f32 %v341, %v265
        %v470 = vadd.f32 %v342, %v264
        %v471 = vadd.f32 %v343, %v265
        %v472 = vadd.f32 %v344, %v264
        %v473 = vadd.f32 %v345, %v265
        %v474 = vadd.f32 %v346, %v264
        %v475 = vadd.f32 %v347, %v265
        %v476 = vadd.f32 %v348, %v264
        %v477 = vadd.f32 %v349, %v265
        %v478 = vadd.f32 %v350, %v264
        %v479 = vadd.f32 %v351, %v265
        %v480 = vadd.f32 %v352, %v264
        %v481 = vadd.f32 %v353, %v265
        %v482 = vadd.f32 %v354, %v264
        %v483 = vadd.f32 %v355, %v265
        %v484 = vadd.f32 %v356, %v264
        %v485 = vadd.f32 %v357, %v265
        %v486 = vadd.f32 %v358, %v264
        %v487 = vadd.f32 %v359, %v265
        %v488 = vadd.f32 %v360, %v264
        %v489 = vadd.f32 %v361, %v265
        %v490 = vadd.f32 %v362, %v264
        %v491 = vadd.f32 %v363, %v265
        %v492 = vadd.f32 %v364, %v266
        %v493 = vadd.f32 %v365, %v267
        %v494 = vadd.f32 %v366, %v266
        %v495 = vadd.f32 %v367, %v267
        %v496 = vadd.f32 %v368, %v266
        %v497 = vadd.f32 %v369, %v267
        %v498 = vadd.f32 %v370, %v266
        %v499 = vadd.f32 %v371, %v267
        %v500 = vadd.f32 %v372, %v266
        %v501 = vadd.f32 %v373, %v267
        %v502 = vadd.f32 %v374, %v266
        %v503 = vadd.f32 %v375, %v267
        %v504 = vadd.f32 %v376, %v266
        %v505 = vadd.f32 %v377, %v267
        %v506 = vadd.f32 %v378, %v266
        %v507 = vadd.f32 %v379, %v267
        %v508 = vadd.f32 %v380, %v266
        %v509 = vadd.f32 %v381, %v267
        %v510 = vadd.f32 %v382, %v266
        %v511 = vadd.f32 %v383, %v267
        %v512 = vadd.f32 %v384, %v266
        %v513 = vadd.f32 %v385, %v267
        %v514 = vadd.f32 %v386, %v266
        %v515 = vadd.f32 %v387, %v267
        %v516 = vadd.f32 %v388, %v266
        %v517 = vadd.f32 %v389, %v267
        %v518 = vadd.f32 %v390, %v266
        %v519 = vadd.f32 %v391, %v267
        %v520 = vadd.f32 %v392, %v266
        %v521 = vadd.f32 %v393, %v267
        %v522 = vadd.f32 %v394, %v266
        %v523 = vadd.f32 %v395, %v267
        %524 = vst [vmem:[%s210] sm:$0xff] %v396
        %525 = vst [vmem:[%s210 + $0x8] sm:$0xff] %v397
        %526 = vst [vmem:[%s210 + $0x10] sm:$0xff] %v398
        %527 = vst [vmem:[%s210 + $0x18] sm:$0xff] %v399
        %528 = vst [vmem:[%s210 + $0x20] sm:$0xff] %v400
        %529 = vst [vmem:[%s210 + $0x28] sm:$0xff] %v401
        %530 = vst [vmem:[%s210 + $0x30] sm:$0xff] %v402
        %531 = vst [vmem:[%s210 + $0x38] sm:$0xff] %v403
        %532 = vst [vmem:[%s210 + $0x40] sm:$0xff] %v404
        %533 = vst [vmem:[%s210 + $0x48] sm:$0xff] %v405
        %534 = vst [vmem:[%s210 + $0x50] sm:$0xff] %v406
        %535 = vst [vmem:[%s210 + $0x58] sm:$0xff] %v407
        %536 = vst [vmem:[%s210 + $0x60] sm:$0xff] %v408
        %537 = vst [vmem:[%s210 + $0x68] sm:$0xff] %v409
        %538 = vst [vmem:[%s210 + $0x70] sm:$0xff] %v410
        %539 = vst [vmem:[%s210 + $0x78] sm:$0xff] %v411
        %540 = vst [vmem:[%s210 + $0x80] sm:$0xff] %v412
        %541 = vst [vmem:[%s210 + $0x88] sm:$0xff] %v413
        %542 = vst [vmem:[%s210 + $0x90] sm:$0xff] %v414
        %543 = vst [vmem:[%s210 + $0x98] sm:$0xff] %v415
        %544 = vst [vmem:[%s210 + $0xa0] sm:$0xff] %v416
        %545 = vst [vmem:[%s210 + $0xa8] sm:$0xff] %v417
        %546 = vst [vmem:[%s210 + $0xb0] sm:$0xff] %v418
        %547 = vst [vmem:[%s210 + $0xb8] sm:$0xff] %v419
        %548 = vst [vmem:[%s210 + $0xc0] sm:$0xff] %v420
        %549 = vst [vmem:[%s210 + $0xc8] sm:$0xff] %v421
        %550 = vst [vmem:[%s210 + $0xd0] sm:$0xff] %v422
        %551 = vst [vmem:[%s210 + $0xd8] sm:$0xff] %v423
        %552 = vst [vmem:[%s210 + $0xe0] sm:$0xff] %v424
        %553 = vst [vmem:[%s210 + $0xe8] sm:$0xff] %v425
        %554 = vst [vmem:[%s210 + $0xf0] sm:$0xff] %v426
        %555 = vst [vmem:[%s210 + $0xf8] sm:$0xff] %v427
        %556 = vst [vmem:[%s210 + $0x100] sm:$0xff] %v428
        %557 = vst [vmem:[%s210 + $0x108] sm:$0xff] %v429
        %558 = vst [vmem:[%s210 + $0x110] sm:$0xff] %v430
        %559 = vst [vmem:[%s210 + $0x118] sm:$0xff] %v431
        %560 = vst [vmem:[%s210 + $0x120] sm:$0xff] %v432
        %561 = vst [vmem:[%s210 + $0x128] sm:$0xff] %v433
        %562 = vst [vmem:[%s210 + $0x130] sm:$0xff] %v434
        %563 = vst [vmem:[%s210 + $0x138] sm:$0xff] %v435
        %564 = vst [vmem:[%s210 + $0x140] sm:$0xff] %v436
        %565 = vst [vmem:[%s210 + $0x148] sm:$0xff] %v437
        %566 = vst [vmem:[%s210 + $0x150] sm:$0xff] %v438
        %567 = vst [vmem:[%s210 + $0x158] sm:$0xff] %v439
        %568 = vst [vmem:[%s210 + $0x160] sm:$0xff] %v440
        %569 = vst [vmem:[%s210 + $0x168] sm:$0xff] %v441
        %570 = vst [vmem:[%s210 + $0x170] sm:$0xff] %v442
        %571 = vst [vmem:[%s210 + $0x178] sm:$0xff] %v443
        %572 = vst [vmem:[%s210 + $0x180] sm:$0xff] %v444
        %573 = vst [vmem:[%s210 + $0x188] sm:$0xff] %v445
        %574 = vst [vmem:[%s210 + $0x190] sm:$0xff] %v446
        %575 = vst [vmem:[%s210 + $0x198] sm:$0xff] %v447
        %576 = vst [vmem:[%s210 + $0x1a0] sm:$0xff] %v448
        %577 = vst [vmem:[%s210 + $0x1a8] sm:$0xff] %v449
        %578 = vst [vmem:[%s210 + $0x1b0] sm:$0xff] %v450
        %579 = vst [vmem:[%s210 + $0x1b8] sm:$0xff] %v451
        %580 = vst [vmem:[%s210 + $0x1c0] sm:$0xff] %v452
        %581 = vst [vmem:[%s210 + $0x1c8] sm:$0xff] %v453
        %582 = vst [vmem:[%s210 + $0x1d0] sm:$0xff] %v454
        %583 = vst [vmem:[%s210 + $0x1d8] sm:$0xff] %v455
        %584 = vst [vmem:[%s210 + $0x1e0] sm:$0xff] %v456
        %585 = vst [vmem:[%s210 + $0x1e8] sm:$0xff] %v457
        %586 = vst [vmem:[%s210 + $0x1f0] sm:$0xff] %v458
        %587 = vst [vmem:[%s210 + $0x1f8] sm:$0xff] %v459
        %588 = vst [vmem:[%s210 + $0x200] sm:$0xff] %v460
        %589 = vst [vmem:[%s210 + $0x208] sm:$0xff] %v461
        %590 = vst [vmem:[%s210 + $0x210] sm:$0xff] %v462
        %591 = vst [vmem:[%s210 + $0x218] sm:$0xff] %v463
        %592 = vst [vmem:[%s210 + $0x220] sm:$0xff] %v464
        %593 = vst [vmem:[%s210 + $0x228] sm:$0xff] %v465
        %594 = vst [vmem:[%s210 + $0x230] sm:$0xff] %v466
        %595 = vst [vmem:[%s210 + $0x238] sm:$0xff] %v467
        %596 = vst [vmem:[%s210 + $0x240] sm:$0xff] %v468
        %597 = vst [vmem:[%s210 + $0x248] sm:$0xff] %v469
        %598 = vst [vmem:[%s210 + $0x250] sm:$0xff] %v470
        %599 = vst [vmem:[%s210 + $0x258] sm:$0xff] %v471
        %600 = vst [vmem:[%s210 + $0x260] sm:$0xff] %v472
        %601 = vst [vmem:[%s210 + $0x268] sm:$0xff] %v473
        %602 = vst [vmem:[%s210 + $0x270] sm:$0xff] %v474
        %603 = vst [vmem:[%s210 + $0x278] sm:$0xff] %v475
        %604 = vst [vmem:[%s210 + $0x280] sm:$0xff] %v476
        %605 = vst [vmem:[%s210 + $0x288] sm:$0xff] %v477
        %606 = vst [vmem:[%s210 + $0x290] sm:$0xff] %v478
        %607 = vst [vmem:[%s210 + $0x298] sm:$0xff] %v479
        %608 = vst [vmem:[%s210 + $0x2a0] sm:$0xff] %v480
        %609 = vst [vmem:[%s210 + $0x2a8] sm:$0xff] %v481
        %610 = vst [vmem:[%s210 + $0x2b0] sm:$0xff] %v482
        %611 = vst [vmem:[%s210 + $0x2b8] sm:$0xff] %v483
        %612 = vst [vmem:[%s210 + $0x2c0] sm:$0xff] %v484
        %613 = vst [vmem:[%s210 + $0x2c8] sm:$0xff] %v485
        %614 = vst [vmem:[%s210 + $0x2d0] sm:$0xff] %v486
        %615 = vst [vmem:[%s210 + $0x2d8] sm:$0xff] %v487
        %616 = vst [vmem:[%s210 + $0x2e0] sm:$0xff] %v488
        %617 = vst [vmem:[%s210 + $0x2e8] sm:$0xff] %v489
        %618 = vst [vmem:[%s210 + $0x2f0] sm:$0xff] %v490
        %619 = vst [vmem:[%s210 + $0x2f8] sm:$0xff] %v491
        %620 = vst [vmem:[%s210 + $0x300] sm:$0xff] %v492
        %621 = vst [vmem:[%s210 + $0x308] sm:$0xff] %v493
        %622 = vst [vmem:[%s210 + $0x310] sm:$0xff] %v494
        %623 = vst [vmem:[%s210 + $0x318] sm:$0xff] %v495
        %624 = vst [vmem:[%s210 + $0x320] sm:$0xff] %v496
        %625 = vst [vmem:[%s210 + $0x328] sm:$0xff] %v497
        %626 = vst [vmem:[%s210 + $0x330] sm:$0xff] %v498
        %627 = vst [vmem:[%s210 + $0x338] sm:$0xff] %v499
        %628 = vst [vmem:[%s210 + $0x340] sm:$0xff] %v500
        %629 = vst [vmem:[%s210 + $0x348] sm:$0xff] %v501
        %630 = vst [vmem:[%s210 + $0x350] sm:$0xff] %v502
        %631 = vst [vmem:[%s210 + $0x358] sm:$0xff] %v503
        %632 = vst [vmem:[%s210 + $0x360] sm:$0xff] %v504
        %633 = vst [vmem:[%s210 + $0x368] sm:$0xff] %v505
        %634 = vst [vmem:[%s210 + $0x370] sm:$0xff] %v506
        %635 = vst [vmem:[%s210 + $0x378] sm:$0xff] %v507
        %636 = vst [vmem:[%s210 + $0x380] sm:$0xff] %v508
        %637 = vst [vmem:[%s210 + $0x388] sm:$0xff] %v509
        %638 = vst [vmem:[%s210 + $0x390] sm:$0xff] %v510
        %639 = vst [vmem:[%s210 + $0x398] sm:$0xff] %v511
        %640 = vst [vmem:[%s210 + $0x3a0] sm:$0xff] %v512
        %641 = vst [vmem:[%s210 + $0x3a8] sm:$0xff] %v513
        %642 = vst [vmem:[%s210 + $0x3b0] sm:$0xff] %v514
        %643 = vst [vmem:[%s210 + $0x3b8] sm:$0xff] %v515
        %644 = vst [vmem:[%s210 + $0x3c0] sm:$0xff] %v516
        %645 = vst [vmem:[%s210 + $0x3c8] sm:$0xff] %v517
        %646 = vst [vmem:[%s210 + $0x3d0] sm:$0xff] %v518
        %647 = vst [vmem:[%s210 + $0x3d8] sm:$0xff] %v519
        %648 = vst [vmem:[%s210 + $0x3e0] sm:$0xff] %v520
        %649 = vst [vmem:[%s210 + $0x3e8] sm:$0xff] %v521
        %650 = vst [vmem:[%s210 + $0x3f0] sm:$0xff] %v522
        %651 = vst [vmem:[%s210 + $0x3f8] sm:$0xff] %v523
        %s652 = sand.u32 %s106, 1
        %s653 = scalar_lea.sflag [#allocation4], %s652
        %s654 = sand.u32 %s106, 1
        %s655 = smul.addr %s654, 1024
        %s656 = scalar_lea.vmem [#allocation5], %s655
        // Predicated region
        $region33: #{tpu_custom_call.1} parent=27 // pred_check
          %p657 = pneg %p116
        $region34: #{tpu_custom_call.1} parent=27 // pred_check_branch
          %659 = sbr.rel (%p657) target = $region36
        $region35: #{tpu_custom_call.1} parent=27 // pred_region
          %s660 = smul.u32 4, %s24
          %s661 = smul.u32 16, %s25
          %s662 = smul.u32 2, %s26
          %664 = vsyncadd %s653, 0
          %s665 = smul.addr %s661, 2
          %s666 = sadd.s32 %s662, %s665
          %s667 = smul.addr %s660, 32
          %s668 = sadd.s32 %s666, %s667
          %s669 = smul.addr %s668, 8
          %s670 = scalar_lea.hbm %s2, %s669
          %s671 = sshll.u32 %s656, 4
          %s672 = int_to_ptr.vmem [resolvable:$true] %s671
          %s673 = sshll.u32 %s670, 4
          %s674 = int_to_ptr.hbm [resolvable:$true] %s673
          %679 = dma.vmem_to_hbm [thread:$0]  %s672, 16384, %s674, %s653, 256, 256, 16
        $region36: #{tpu_custom_call.1} parent=27 // pred_fallthru
          _
      $region28: #{tpu_custom_call.1} parent=5 // pred_fallthru
        _
      %p680 = scmp.le.s32.totalorder 2, %s14
      // Predicated region
      $region37: #{tpu_custom_call.1} parent=5 // pred_check
        %p681 = pneg %p680
      $region38: #{tpu_custom_call.1} parent=5 // pred_check_branch
        %683 = sbr.rel (%p681) target = $region40
      $region39: #{tpu_custom_call.1} parent=5 // pred_region
        %s684 = ssub.s32 %s14, 2
        // Predicated region
        $region41: #{tpu_custom_call.1} parent=39 // pred_check
          %p685 = pneg %p122
        $region42: #{tpu_custom_call.1} parent=39 // pred_check_branch
          %687 = sbr.rel (%p685) target = $region44
        $region43: #{tpu_custom_call.1} parent=39 // pred_region
          %s688 = sand.u32 %s107, 1
          %s689 = scalar_lea.sflag [#allocation4], %s688
          %s690 = sand.u32 %s107, 1
          %s691 = smul.addr %s690, 1024
          %s692 = scalar_lea.vmem [#allocation5], %s691
          %694 = dma.done %s689, 16384
        $region44: #{tpu_custom_call.1} parent=39 // pred_fallthru
          _
      $region40: #{tpu_custom_call.1} parent=5 // pred_fallthru
        _
    $region6: #{tpu_custom_call.1} parent=1 // loop_footer
      %s18 = sadd.s32 1, %s14
    $region7: #{tpu_custom_call.1} parent=1 // loop_footer_branch
      %13 = sbr.rel target = $region3
    $region8: #{tpu_custom_call.1} parent=1 // loop_exit
      _
    %695 = vsyncpa [#allocation3], 1
    %s696 = scalar_lea.sflag [#allocation3], 1
    %697 = vsyncpa %s696, 1
    %698 = vsyncpa [#allocation4], 1
    %s699 = scalar_lea.sflag [#allocation4], 1
    %700 = vsyncpa %s699, 1

</llo_original>
